<compile_context>
chip_gen: v5e
topology: v5e:2x2
jax: 0.10.0
libtpu: 0.0.40
codegen_flags: <defaults>
</compile_context>

<pallas_src>
import jax
import jax.numpy as jnp
from jax.experimental import pallas as pl
from jax.experimental.pallas import tpu as pltpu


def _round_up(n, m):
    return ((n + m - 1) // m) * m


def _mlp_kernel(x_ref, w1_ref, b1_ref, w2_ref, b2_ref, o_ref):
    # fc1 + ReLU (MXU matmul, f32 accumulation, full f32 precision)
    h = jnp.dot(x_ref[...], w1_ref[...],
                preferred_element_type=jnp.float32,
                precision=jax.lax.Precision.HIGHEST)
    h = jnp.maximum(h + b1_ref[...], 0.0)            # (TB, 64) + (1, 64) broadcast
    # fc2 + sigmoid
    y = jnp.dot(h, w2_ref[...],
                preferred_element_type=jnp.float32,
                precision=jax.lax.Precision.HIGHEST)
    o_ref[...] = jax.nn.sigmoid(y + b2_ref[...]).astype(o_ref.dtype)


def _pick_batch_tile(B, in_dim, hidden, out_dim, x_itemsize, out_itemsize,
                     block_batch):
    """Pick a batch tile that fits a conservative VMEM budget on every TPU gen."""
    # Per-row VMEM bytes: double-buffered x block + double-buffered out block
    # + f32 intermediates (hidden activation, pre-sigmoid logits).
    per_row = (2 * in_dim * x_itemsize
               + 2 * out_dim * out_itemsize
               + 4 * (hidden + out_dim))
    budget = 24 * 1024 * 1024          # leaves headroom even for v7x's 32 MiB scoped VMEM
    tb_cap = max(8, (budget // per_row) // 8 * 8)

    tb = min(block_batch, _round_up(B, 8), tb_cap)
    tb = max(8, _round_up(tb, 8))

    # v7x has 2 TensorCores per chip; keep >= 2 grid steps when the batch allows
    # it so the "parallel" batch axis can be sharded across them.
    if B > 16 and pl.cdiv(B, tb) < 2:
        tb = max(8, _round_up(pl.cdiv(B, 2), 8))
    return tb


def personalization_nn_forward(x, w1, b1, w2, b2, *, block_batch=4096,
                               out_dtype=None):
    """Forward pass of PersonalizationNN.

    x:  (B, input_dim)           activations (f32 or bf16)
    w1: (input_dim, 64)  b1: (1, 64)
    w2: (64, output_dim) b2: (1, output_dim)
    Returns (B, output_dim) in `out_dtype` (defaults to x.dtype).
    """
    B, in_dim = x.shape
    hidden = w1.shape[1]
    out_dim = w2.shape[1]
    out_dtype = x.dtype if out_dtype is None else out_dtype

    x_bytes = jnp.dtype(x.dtype).itemsize
    o_bytes = jnp.dtype(out_dtype).itemsize
    w_bytes = (w1.size * jnp.dtype(w1.dtype).itemsize
               + b1.size * jnp.dtype(b1.dtype).itemsize
               + w2.size * jnp.dtype(w2.dtype).itemsize
               + b2.size * jnp.dtype(b2.dtype).itemsize)

    tb = _pick_batch_tile(B, in_dim, hidden, out_dim, x_bytes, o_bytes,
                          block_batch)
    grid = (pl.cdiv(B, tb),)            # ragged last block handled by Pallas

    cost = pl.CostEstimate(
        flops=2 * B * (in_dim * hidden + hidden * out_dim),
        transcendentals=B * out_dim,                     # sigmoid exp
        bytes_accessed=B * in_dim * x_bytes + w_bytes + B * out_dim * o_bytes,
    )

    out = pl.pallas_call(
        _mlp_kernel,
        out_shape=jax.ShapeDtypeStruct((B, out_dim), out_dtype),
        grid_spec=pl.GridSpec(
            grid=grid,
            in_specs=[
                # activations: tiled over the batch grid axis
                pl.BlockSpec((tb, in_dim), lambda i: (i, 0)),
                # weights / biases: VMEM-resident (same block every step)
                pl.BlockSpec((in_dim, hidden), lambda i: (0, 0)),
                pl.BlockSpec((1, hidden), lambda i: (0, 0)),
                pl.BlockSpec((hidden, out_dim), lambda i: (0, 0)),
                pl.BlockSpec((1, out_dim), lambda i: (0, 0)),
            ],
            out_specs=pl.BlockSpec((tb, out_dim), lambda i: (i, 0)),
        ),
        compiler_params=pltpu.CompilerParams(
            dimension_semantics=("parallel",),   # batch axis -> megacore split
        ),
        cost_estimate=cost,
    )(x, w1, b1, w2, b2)

    return out


def _reference_forward(x, w1, b1, w2, b2):
    h = jnp.maximum(x @ w1 + b1, 0.0)
    return jax.nn.sigmoid(h @ w2 + b2)


if __name__ == "__main__":
    key = jax.random.PRNGKey(0)

    batch = 8
    input_dim = 32
    hidden = 64          # fixed by the module (fc1 -> 64)
    output_dim = 16

    k_x, k_w1, k_b1, k_w2, k_b2, k_x2 = jax.random.split(key, 6)

    x = jax.random.normal(k_x, (batch, input_dim), dtype=jnp.float32)

    # Deterministic parameter init (PyTorch-like uniform fan-in scaling),
    # weights stored as (in, out) == W.T of the PyTorch layout.
    bound1 = 1.0 / jnp.sqrt(input_dim)
    w1 = jax.random.uniform(k_w1, (input_dim, hidden), jnp.float32, -bound1, bound1)
    b1 = jax.random.uniform(k_b1, (1, hidden), jnp.float32, -bound1, bound1)

    bound2 = 1.0 / jnp.sqrt(hidden)
    w2 = jax.random.uniform(k_w2, (hidden, output_dim), jnp.float32, -bound2, bound2)
    b2 = jax.random.uniform(k_b2, (1, output_dim), jnp.float32, -bound2, bound2)

    # --- small batch (single grid step) ---------------------------------------
    out = personalization_nn_forward(x, w1, b1, w2, b2)
    out = jax.block_until_ready(out)
    ref = _reference_forward(x, w1, b1, w2, b2)
    assert out.shape == (batch, output_dim)
    assert jnp.allclose(out, ref, atol=1e-5, rtol=1e-5), "mismatch vs reference (small batch)"

    # --- batch that exercises multiple grid steps + a ragged (masked) last block
    big_batch = 300
    x_big = jax.random.normal(k_x2, (big_batch, input_dim), dtype=jnp.float32)
    out_big = personalization_nn_forward(x_big, w1, b1, w2, b2, block_batch=128)
    out_big = jax.block_until_ready(out_big)
    ref_big = _reference_forward(x_big, w1, b1, w2, b2)
    assert out_big.shape == (big_batch, output_dim)
    assert jnp.allclose(out_big, ref_big, atol=1e-5, rtol=1e-5), "mismatch vs reference (tiled batch)"

    print("KERNEL_OK")
</pallas_src>

<mosaic_0001>
module attributes {stable_mosaic.version = 11 : i64} {
  func.func @_mlp_kernel(%arg0: i32, %arg1: memref<8x32xf32, #tpu.memory_space<vmem>>, %arg2: memref<32x64xf32, #tpu.memory_space<vmem>>, %arg3: memref<1x64xf32, #tpu.memory_space<vmem>>, %arg4: memref<64x16xf32, #tpu.memory_space<vmem>>, %arg5: memref<1x16xf32, #tpu.memory_space<vmem>>, %arg6: memref<8x16xf32, #tpu.memory_space<vmem>>) attributes {dimension_semantics = [#tpu.dimension_semantics<parallel>], iteration_bounds = array<i64: 1>, scalar_prefetch = 0 : i64, scratch_operands = 0 : i64, tpu.core_type = #tpu.core_type<tc>, window_params = [{transform_indices = @transform_0, window_bounds = array<i64: 8, 32>}, {pipeline_mode = #tpu.pipeline_mode<synchronous>, transform_indices = @transform_1, window_bounds = array<i64: 32, 64>}, {pipeline_mode = #tpu.pipeline_mode<synchronous>, transform_indices = @transform_2, window_bounds = array<i64: 1, 64>}, {pipeline_mode = #tpu.pipeline_mode<synchronous>, transform_indices = @transform_3, window_bounds = array<i64: 64, 16>}, {pipeline_mode = #tpu.pipeline_mode<synchronous>, transform_indices = @transform_4, window_bounds = array<i64: 1, 16>}, {transform_indices = @transform_5, window_bounds = array<i64: 8, 16>}]} {
    %c0 = arith.constant 0 : index
    %c0_0 = arith.constant 0 : index
    %0 = vector.load %arg1[%c0, %c0_0] : memref<8x32xf32, #tpu.memory_space<vmem>>, vector<8x32xf32>
    %c0_1 = arith.constant 0 : index
    %c0_2 = arith.constant 0 : index
    %1 = vector.load %arg2[%c0_1, %c0_2] : memref<32x64xf32, #tpu.memory_space<vmem>>, vector<32x64xf32>
    %cst = arith.constant dense<0.000000e+00> : vector<8x64xf32>
    %2 = tpu.matmul %0, %1, %cst {dimension_numbers = #tpu.dot_dimension_numbers<[1], [0], [0], [1], [0, 0, 1, 1], [], []>, precision = #tpu.contract_precision<fp32>} : vector<8x32xf32>, vector<32x64xf32>, vector<8x64xf32> -> vector<8x64xf32>
    %c0_3 = arith.constant 0 : index
    %c0_4 = arith.constant 0 : index
    %3 = vector.load %arg3[%c0_3, %c0_4] : memref<1x64xf32, #tpu.memory_space<vmem>>, vector<1x64xf32>
    %4 = vector.broadcast %3 : vector<1x64xf32> to vector<8x64xf32>
    %5 = arith.addf %2, %4 : vector<8x64xf32>
    %cst_5 = arith.constant 0.000000e+00 : f32
    %6 = vector.broadcast %cst_5 : f32 to vector<8x64xf32>
    %7 = arith.maximumf %5, %6 : vector<8x64xf32>
    %c0_6 = arith.constant 0 : index
    %c0_7 = arith.constant 0 : index
    %8 = vector.load %arg4[%c0_6, %c0_7] : memref<64x16xf32, #tpu.memory_space<vmem>>, vector<64x16xf32>
    %cst_8 = arith.constant dense<0.000000e+00> : vector<8x16xf32>
    %9 = tpu.matmul %7, %8, %cst_8 {dimension_numbers = #tpu.dot_dimension_numbers<[1], [0], [0], [1], [0, 0, 1, 1], [], []>, precision = #tpu.contract_precision<fp32>} : vector<8x64xf32>, vector<64x16xf32>, vector<8x16xf32> -> vector<8x16xf32>
    %c0_9 = arith.constant 0 : index
    %c0_10 = arith.constant 0 : index
    %10 = vector.load %arg5[%c0_9, %c0_10] : memref<1x16xf32, #tpu.memory_space<vmem>>, vector<1x16xf32>
    %11 = vector.broadcast %10 : vector<1x16xf32> to vector<8x16xf32>
    %12 = arith.addf %9, %11 : vector<8x16xf32>
    %13 = arith.negf %12 : vector<8x16xf32>
    %14 = math.exp %13 : vector<8x16xf32>
    %cst_11 = arith.constant 1.000000e+00 : f32
    %15 = vector.broadcast %cst_11 : f32 to vector<8x16xf32>
    %16 = arith.addf %15, %14 : vector<8x16xf32>
    %17 = arith.divf %15, %16 : vector<8x16xf32>
    %c0_12 = arith.constant 0 : index
    %c0_13 = arith.constant 0 : index
    %18 = vector.load %arg6[%c0_12, %c0_13] : memref<8x16xf32, #tpu.memory_space<vmem>>, vector<8x16xf32>
    tpu.vector_store %arg6[%c0_12, %c0_13], %17 {strides = array<i32>} : memref<8x16xf32, #tpu.memory_space<vmem>>, vector<8x16xf32>,
    return
  }
  func.func @transform_0(%arg0: i32) -> (i32, i32) {
    %c0_i32 = arith.constant 0 : i32
    %c0_i32_0 = arith.constant 0 : i32
    return %arg0, %c0_i32 : i32, i32
  }
  func.func @transform_1(%arg0: i32) -> (i32, i32) {
    %c0_i32 = arith.constant 0 : i32
    %c0_i32_0 = arith.constant 0 : i32
    %c0_i32_1 = arith.constant 0 : i32
    return %c0_i32, %c0_i32_0 : i32, i32
  }
  func.func @transform_2(%arg0: i32) -> (i32, i32) {
    %c0_i32 = arith.constant 0 : i32
    %c0_i32_0 = arith.constant 0 : i32
    %c0_i32_1 = arith.constant 0 : i32
    return %c0_i32, %c0_i32_0 : i32, i32
  }
  func.func @transform_3(%arg0: i32) -> (i32, i32) {
    %c0_i32 = arith.constant 0 : i32
    %c0_i32_0 = arith.constant 0 : i32
    %c0_i32_1 = arith.constant 0 : i32
    return %c0_i32, %c0_i32_0 : i32, i32
  }
  func.func @transform_4(%arg0: i32) -> (i32, i32) {
    %c0_i32 = arith.constant 0 : i32
    %c0_i32_0 = arith.constant 0 : i32
    %c0_i32_1 = arith.constant 0 : i32
    return %c0_i32, %c0_i32_0 : i32, i32
  }
  func.func @transform_5(%arg0: i32) -> (i32, i32) {
    %c0_i32 = arith.constant 0 : i32
    %c0_i32_0 = arith.constant 0 : i32
    return %arg0, %c0_i32 : i32, i32
  }
}

</mosaic_0001>

<llo_original>
// kernel: tpu_custom_call.1
$region0: #{tpu_custom_call.1}
  #allocation0 [shape = 'u32[]', space=smem, size = 0x4, offset = 0x4, fixed_abs, tag = 'smem constant byte address 0x4 - core index']
  #allocation1 [shape = 'u32[72,128]{1,0:T(1,128)}', space=vmem, size = 0x9000, scoped, tag = 'internal scratch']
  %s0 = inlined_call_operand.vmem [shape: f32[8,32], index: 0, kind: input, shape index: {}]
  %s1 = inlined_call_operand.vmem [shape: f32[32,64], index: 1, kind: input, shape index: {}]
  %s2 = inlined_call_operand.vmem [shape: f32[1,64], index: 2, kind: input, shape index: {}]
  %s3 = inlined_call_operand.vmem [shape: f32[64,16], index: 3, kind: input, shape index: {}]
  %s4 = inlined_call_operand.vmem [shape: f32[1,16], index: 4, kind: input, shape index: {}]
  %s5 = inlined_call_operand.hbm [shape: f32[8,16], index: 5, kind: output, shape index: {}]
  %s6 = sld [smem:[#allocation0]]
  $region30: #{tpu_custom_call.1} parent=0
    _
  %s8 = ssub.s32 1, %s6
  %s9 = scalar_select 0, %s8, %s6
  $region1: #{tpu_custom_call.1} parent=0
    #allocation2 [shape = 'u8[4096]{0}', space=vmem, size = 0x1000, scoped, tag = 'output window, operand 0, single buffered']
    #allocation3 [shape = 's32[1]{0}', space=sflag, size = 0x4, scoped, tag = 'scoped memory for tpu_custom_call.1']
    %10 = vsyncpa [#allocation3], 0
    // Predicated region
    $region2: #{tpu_custom_call.1} parent=1 // pred_check
      _
    $region3: #{tpu_custom_call.1} parent=1 // pred_check_branch
      %12 = sbr.rel (0) target = $region5
    $region4: #{tpu_custom_call.1} parent=1 // pred_region
      _
    $region5: #{tpu_custom_call.1} parent=1 // pred_fallthru
      _
    // Predicated region
    $region6: #{tpu_custom_call.1} parent=1 // pred_check
      _
    $region7: #{tpu_custom_call.1} parent=1 // pred_check_branch
      %14 = sbr.rel (0) target = $region9
    $region8: #{tpu_custom_call.1} parent=1 // pred_region
      _
    $region9: #{tpu_custom_call.1} parent=1 // pred_fallthru
      _
    // Predicated region
    $region10: #{tpu_custom_call.1} parent=1 // pred_check
      _
    $region11: #{tpu_custom_call.1} parent=1 // pred_check_branch
      %16 = sbr.rel (0) target = $region13
    $region12: #{tpu_custom_call.1} parent=1 // pred_region
      _
    $region13: #{tpu_custom_call.1} parent=1 // pred_fallthru
      _
    // Predicated region
    $region14: #{tpu_custom_call.1} parent=1 // pred_check
      _
    $region15: #{tpu_custom_call.1} parent=1 // pred_check_branch
      %18 = sbr.rel (0) target = $region17
    $region16: #{tpu_custom_call.1} parent=1 // pred_region
      _
    $region17: #{tpu_custom_call.1} parent=1 // pred_fallthru
      _
    // Predicated region
    $region18: #{tpu_custom_call.1} parent=1 // pred_check
      _
    $region19: #{tpu_custom_call.1} parent=1 // pred_check_branch
      %20 = sbr.rel (0) target = $region21
    $region20: #{tpu_custom_call.1} parent=1 // pred_region
      _
    $region21: #{tpu_custom_call.1} parent=1 // pred_fallthru
      _
    %v21 = vld [vmem:[%s0] sm:$0xff]
    %v22 = vld [vmem:[%s1] sm:$0xff]
    %v23 = vld [vmem:[%s1 + $0x8] sm:$0xff]
    %v24 = vld [vmem:[%s1 + $0x10] sm:$0xff]
    %v25 = vld [vmem:[%s1 + $0x18] sm:$0xff]
    %v26 = vld [vmem:[%s2] sm:$0x1]
    %v28 = vperm.slane %v26, 0
    %vm30 = vcmask 261120
    %v32 = vsel %vm30, %v21, 0
    %34 = vmatpush.msra.mxu0 0.0
    %35 = vmatpush.msra.mxu0 0.0
    %36 = vmatpush.msra.mxu0 0.0
    %37 = vmatpush.msra.mxu0 0.0
    %38 = vmatpush.msra.mxu0 0.0
    %39 = vmatpush.msra.mxu0 0.0
    %40 = vmatpush.msra.mxu0 0.0
    %41 = vmatpush.msra.mxu0 0.0
    %42 = vmatpush.msra.mxu0 0.0
    %43 = vmatpush.msra.mxu0 0.0
    %44 = vmatpush.msra.mxu0 0.0
    %45 = vmatpush.msra.mxu0 0.0
    %v46 = vand.u32 %v25, 4294901760
    %47 = vmatpush.msra.mxu0 %v46
    %v48 = vand.u32 %v24, 4294901760
    %49 = vmatpush.msra.mxu0 %v48
    %v50 = vand.u32 %v23, 4294901760
    %51 = vmatpush.msra.mxu0 %v50
    %v52 = vand.u32 %v22, 4294901760
    %53 = vmatpush.msra.mxu0 %v52
    %v54 = vand.u32 %v32, 4294901760
    %v55 = vsub.f32 %v32, %v54
    %v56 = vand.u32 %v55, 4294901760
    %v57 = vsub.f32 %v55, %v56
    %v58 = vand.u32 %v57, 4294901760
    %59 = vmatmul.f32.gmra.mxu0 %v58
    %v60 = vpop.f32.mrf.mxu0
    %v61 = vadd.f32 %v28, %v60
    %62 = vdwg.mxu0
    %63 = vmatpush.msra.mxu0 0.0
    %64 = vmatpush.msra.mxu0 0.0
    %65 = vmatpush.msra.mxu0 0.0
    %66 = vmatpush.msra.mxu0 0.0
    %67 = vmatpush.msra.mxu0 0.0
    %68 = vmatpush.msra.mxu0 0.0
    %69 = vmatpush.msra.mxu0 0.0
    %70 = vmatpush.msra.mxu0 0.0
    %71 = vmatpush.msra.mxu0 0.0
    %72 = vmatpush.msra.mxu0 0.0
    %73 = vmatpush.msra.mxu0 0.0
    %74 = vmatpush.msra.mxu0 0.0
    %v75 = vand.u32 %v25, 4294901760
    %v76 = vsub.f32 %v25, %v75
    %v77 = vand.u32 %v76, 4294901760
    %v78 = vsub.f32 %v76, %v77
    %v79 = vand.u32 %v78, 4294901760
    %80 = vmatpush.msra.mxu0 %v79
    %v81 = vand.u32 %v24, 4294901760
    %v82 = vsub.f32 %v24, %v81
    %v83 = vand.u32 %v82, 4294901760
    %v84 = vsub.f32 %v82, %v83
    %v85 = vand.u32 %v84, 4294901760
    %86 = vmatpush.msra.mxu0 %v85
    %v87 = vand.u32 %v23, 4294901760
    %v88 = vsub.f32 %v23, %v87
    %v89 = vand.u32 %v88, 4294901760
    %v90 = vsub.f32 %v88, %v89
    %v91 = vand.u32 %v90, 4294901760
    %92 = vmatpush.msra.mxu0 %v91
    %v93 = vand.u32 %v22, 4294901760
    %v94 = vsub.f32 %v22, %v93
    %v95 = vand.u32 %v94, 4294901760
    %v96 = vsub.f32 %v94, %v95
    %v97 = vand.u32 %v96, 4294901760
    %98 = vmatpush.msra.mxu0 %v97
    %v99 = vand.u32 %v32, 4294901760
    %100 = vmatmul.f32.gmra.mxu0 %v99
    %v101 = vpop.f32.mrf.mxu0
    %v102 = vadd.f32 %v61, %v101
    %103 = vdwg.mxu0
    %104 = vmatpush.msra.mxu0 0.0
    %105 = vmatpush.msra.mxu0 0.0
    %106 = vmatpush.msra.mxu0 0.0
    %107 = vmatpush.msra.mxu0 0.0
    %108 = vmatpush.msra.mxu0 0.0
    %109 = vmatpush.msra.mxu0 0.0
    %110 = vmatpush.msra.mxu0 0.0
    %111 = vmatpush.msra.mxu0 0.0
    %112 = vmatpush.msra.mxu0 0.0
    %113 = vmatpush.msra.mxu0 0.0
    %114 = vmatpush.msra.mxu0 0.0
    %115 = vmatpush.msra.mxu0 0.0
    %v116 = vand.u32 %v25, 4294901760
    %v117 = vsub.f32 %v25, %v116
    %118 = vmatpush.msra.mxu0 %v117
    %v119 = vand.u32 %v24, 4294901760
    %v120 = vsub.f32 %v24, %v119
    %121 = vmatpush.msra.mxu0 %v120
    %v122 = vand.u32 %v23, 4294901760
    %v123 = vsub.f32 %v23, %v122
    %124 = vmatpush.msra.mxu0 %v123
    %v125 = vand.u32 %v22, 4294901760
    %v126 = vsub.f32 %v22, %v125
    %127 = vmatpush.msra.mxu0 %v126
    %v128 = vand.u32 %v32, 4294901760
    %v129 = vsub.f32 %v32, %v128
    %130 = vmatmul.f32.gmra.mxu0 %v129
    %v131 = vpop.f32.mrf.mxu0
    %v132 = vadd.f32 %v102, %v131
    %133 = vdwg.mxu0
    %134 = vmatpush.msra.mxu0 0.0
    %135 = vmatpush.msra.mxu0 0.0
    %136 = vmatpush.msra.mxu0 0.0
    %137 = vmatpush.msra.mxu0 0.0
    %138 = vmatpush.msra.mxu0 0.0
    %139 = vmatpush.msra.mxu0 0.0
    %140 = vmatpush.msra.mxu0 0.0
    %141 = vmatpush.msra.mxu0 0.0
    %142 = vmatpush.msra.mxu0 0.0
    %143 = vmatpush.msra.mxu0 0.0
    %144 = vmatpush.msra.mxu0 0.0
    %145 = vmatpush.msra.mxu0 0.0
    %v146 = vand.u32 %v25, 4294901760
    %147 = vmatpush.msra.mxu0 %v146
    %v148 = vand.u32 %v24, 4294901760
    %149 = vmatpush.msra.mxu0 %v148
    %v150 = vand.u32 %v23, 4294901760
    %151 = vmatpush.msra.mxu0 %v150
    %v152 = vand.u32 %v22, 4294901760
    %153 = vmatpush.msra.mxu0 %v152
    %v154 = vand.u32 %v32, 4294901760
    %v155 = vsub.f32 %v32, %v154
    %v156 = vand.u32 %v155, 4294901760
    %157 = vmatmul.f32.gmra.mxu0 %v156
    %v158 = vpop.f32.mrf.mxu0
    %v159 = vadd.f32 %v132, %v158
    %160 = vdwg.mxu0
    %161 = vmatpush.msra.mxu0 0.0
    %162 = vmatpush.msra.mxu0 0.0
    %163 = vmatpush.msra.mxu0 0.0
    %164 = vmatpush.msra.mxu0 0.0
    %165 = vmatpush.msra.mxu0 0.0
    %166 = vmatpush.msra.mxu0 0.0
    %167 = vmatpush.msra.mxu0 0.0
    %168 = vmatpush.msra.mxu0 0.0
    %169 = vmatpush.msra.mxu0 0.0
    %170 = vmatpush.msra.mxu0 0.0
    %171 = vmatpush.msra.mxu0 0.0
    %172 = vmatpush.msra.mxu0 0.0
    %v173 = vand.u32 %v25, 4294901760
    %v174 = vsub.f32 %v25, %v173
    %v175 = vand.u32 %v174, 4294901760
    %176 = vmatpush.msra.mxu0 %v175
    %v177 = vand.u32 %v24, 4294901760
    %v178 = vsub.f32 %v24, %v177
    %v179 = vand.u32 %v178, 4294901760
    %180 = vmatpush.msra.mxu0 %v179
    %v181 = vand.u32 %v23, 4294901760
    %v182 = vsub.f32 %v23, %v181
    %v183 = vand.u32 %v182, 4294901760
    %184 = vmatpush.msra.mxu0 %v183
    %v185 = vand.u32 %v22, 4294901760
    %v186 = vsub.f32 %v22, %v185
    %v187 = vand.u32 %v186, 4294901760
    %188 = vmatpush.msra.mxu0 %v187
    %v189 = vand.u32 %v32, 4294901760
    %190 = vmatmul.f32.gmra.mxu0 %v189
    %v191 = vpop.f32.mrf.mxu0
    %v192 = vadd.f32 %v159, %v191
    %193 = vdwg.mxu0
    %194 = vmatpush.msra.mxu0 0.0
    %195 = vmatpush.msra.mxu0 0.0
    %196 = vmatpush.msra.mxu0 0.0
    %197 = vmatpush.msra.mxu0 0.0
    %198 = vmatpush.msra.mxu0 0.0
    %199 = vmatpush.msra.mxu0 0.0
    %200 = vmatpush.msra.mxu0 0.0
    %201 = vmatpush.msra.mxu0 0.0
    %202 = vmatpush.msra.mxu0 0.0
    %203 = vmatpush.msra.mxu0 0.0
    %204 = vmatpush.msra.mxu0 0.0
    %205 = vmatpush.msra.mxu0 0.0
    %v206 = vand.u32 %v25, 4294901760
    %207 = vmatpush.msra.mxu0 %v206
    %v208 = vand.u32 %v24, 4294901760
    %209 = vmatpush.msra.mxu0 %v208
    %v210 = vand.u32 %v23, 4294901760
    %211 = vmatpush.msra.mxu0 %v210
    %v212 = vand.u32 %v22, 4294901760
    %213 = vmatpush.msra.mxu0 %v212
    %v214 = vand.u32 %v32, 4294901760
    %215 = vmatmul.f32.gmra.mxu0 %v214
    %v216 = vpop.f32.mrf.mxu0
    %v217 = vadd.f32 %v192, %v216
    %218 = vdwg.mxu0
    %v219 = vmax.f32 %v217, 0.0
    %v220 = vld [vmem:[%s3] sm:$0xff]
    %v221 = vld [vmem:[%s3 + $0x8] sm:$0xff]
    %v222 = vld [vmem:[%s3 + $0x10] sm:$0xff]
    %v223 = vld [vmem:[%s3 + $0x18] sm:$0xff]
    %v224 = vld [vmem:[%s3 + $0x20] sm:$0xff]
    %v225 = vld [vmem:[%s3 + $0x28] sm:$0xff]
    %v226 = vld [vmem:[%s3 + $0x30] sm:$0xff]
    %v227 = vld [vmem:[%s3 + $0x38] sm:$0xff]
    %v228 = vld [vmem:[%s4] sm:$0x1]
    %v230 = vperm.slane %v228, 0
    %vm232 = vcmask 523264
    %v234 = vsel %vm232, %v219, 0
    %236 = vmatpush.msra.mxu0 0.0
    %237 = vmatpush.msra.mxu0 0.0
    %238 = vmatpush.msra.mxu0 0.0
    %239 = vmatpush.msra.mxu0 0.0
    %240 = vmatpush.msra.mxu0 0.0
    %241 = vmatpush.msra.mxu0 0.0
    %242 = vmatpush.msra.mxu0 0.0
    %243 = vmatpush.msra.mxu0 0.0
    %v244 = vand.u32 %v227, 4294901760
    %245 = vmatpush.msra.mxu0 %v244
    %v246 = vand.u32 %v226, 4294901760
    %247 = vmatpush.msra.mxu0 %v246
    %v248 = vand.u32 %v225, 4294901760
    %249 = vmatpush.msra.mxu0 %v248
    %v250 = vand.u32 %v224, 4294901760
    %251 = vmatpush.msra.mxu0 %v250
    %v252 = vand.u32 %v223, 4294901760
    %253 = vmatpush.msra.mxu0 %v252
    %v254 = vand.u32 %v222, 4294901760
    %255 = vmatpush.msra.mxu0 %v254
    %v256 = vand.u32 %v221, 4294901760
    %257 = vmatpush.msra.mxu0 %v256
    %v258 = vand.u32 %v220, 4294901760
    %259 = vmatpush.msra.mxu0 %v258
    %v260 = vand.u32 %v234, 4294901760
    %v261 = vsub.f32 %v234, %v260
    %v262 = vand.u32 %v261, 4294901760
    %v263 = vsub.f32 %v261, %v262
    %v264 = vand.u32 %v263, 4294901760
    %265 = vmatmul.f32.gmra.mxu0 %v264
    %v266 = vpop.f32.mrf.mxu0
    %v267 = vadd.f32 %v230, %v266
    %268 = vdwg.mxu0
    %269 = vmatpush.msra.mxu0 0.0
    %270 = vmatpush.msra.mxu0 0.0
    %271 = vmatpush.msra.mxu0 0.0
    %272 = vmatpush.msra.mxu0 0.0
    %273 = vmatpush.msra.mxu0 0.0
    %274 = vmatpush.msra.mxu0 0.0
    %275 = vmatpush.msra.mxu0 0.0
    %276 = vmatpush.msra.mxu0 0.0
    %v277 = vand.u32 %v227, 4294901760
    %v278 = vsub.f32 %v227, %v277
    %v279 = vand.u32 %v278, 4294901760
    %v280 = vsub.f32 %v278, %v279
    %v281 = vand.u32 %v280, 4294901760
    %282 = vmatpush.msra.mxu0 %v281
    %v283 = vand.u32 %v226, 4294901760
    %v284 = vsub.f32 %v226, %v283
    %v285 = vand.u32 %v284, 4294901760
    %v286 = vsub.f32 %v284, %v285
    %v287 = vand.u32 %v286, 4294901760
    %288 = vmatpush.msra.mxu0 %v287
    %v289 = vand.u32 %v225, 4294901760
    %v290 = vsub.f32 %v225, %v289
    %v291 = vand.u32 %v290, 4294901760
    %v292 = vsub.f32 %v290, %v291
    %v293 = vand.u32 %v292, 4294901760
    %294 = vmatpush.msra.mxu0 %v293
    %v295 = vand.u32 %v224, 4294901760
    %v296 = vsub.f32 %v224, %v295
    %v297 = vand.u32 %v296, 4294901760
    %v298 = vsub.f32 %v296, %v297
    %v299 = vand.u32 %v298, 4294901760
    %300 = vmatpush.msra.mxu0 %v299
    %v301 = vand.u32 %v223, 4294901760
    %v302 = vsub.f32 %v223, %v301
    %v303 = vand.u32 %v302, 4294901760
    %v304 = vsub.f32 %v302, %v303
    %v305 = vand.u32 %v304, 4294901760
    %306 = vmatpush.msra.mxu0 %v305
    %v307 = vand.u32 %v222, 4294901760
    %v308 = vsub.f32 %v222, %v307
    %v309 = vand.u32 %v308, 4294901760
    %v310 = vsub.f32 %v308, %v309
    %v311 = vand.u32 %v310, 4294901760
    %312 = vmatpush.msra.mxu0 %v311
    %v313 = vand.u32 %v221, 4294901760
    %v314 = vsub.f32 %v221, %v313
    %v315 = vand.u32 %v314, 4294901760
    %v316 = vsub.f32 %v314, %v315
    %v317 = vand.u32 %v316, 4294901760
    %318 = vmatpush.msra.mxu0 %v317
    %v319 = vand.u32 %v220, 4294901760
    %v320 = vsub.f32 %v220, %v319
    %v321 = vand.u32 %v320, 4294901760
    %v322 = vsub.f32 %v320, %v321
    %v323 = vand.u32 %v322, 4294901760
    %324 = vmatpush.msra.mxu0 %v323
    %v325 = vand.u32 %v234, 4294901760
    %326 = vmatmul.f32.gmra.mxu0 %v325
    %v327 = vpop.f32.mrf.mxu0
    %v328 = vadd.f32 %v267, %v327
    %329 = vdwg.mxu0
    %330 = vmatpush.msra.mxu0 0.0
    %331 = vmatpush.msra.mxu0 0.0
    %332 = vmatpush.msra.mxu0 0.0
    %333 = vmatpush.msra.mxu0 0.0
    %334 = vmatpush.msra.mxu0 0.0
    %335 = vmatpush.msra.mxu0 0.0
    %336 = vmatpush.msra.mxu0 0.0
    %337 = vmatpush.msra.mxu0 0.0
    %v338 = vand.u32 %v227, 4294901760
    %v339 = vsub.f32 %v227, %v338
    %340 = vmatpush.msra.mxu0 %v339
    %v341 = vand.u32 %v226, 4294901760
    %v342 = vsub.f32 %v226, %v341
    %343 = vmatpush.msra.mxu0 %v342
    %v344 = vand.u32 %v225, 4294901760
    %v345 = vsub.f32 %v225, %v344
    %346 = vmatpush.msra.mxu0 %v345
    %v347 = vand.u32 %v224, 4294901760
    %v348 = vsub.f32 %v224, %v347
    %349 = vmatpush.msra.mxu0 %v348
    %v350 = vand.u32 %v223, 4294901760
    %v351 = vsub.f32 %v223, %v350
    %352 = vmatpush.msra.mxu0 %v351
    %v353 = vand.u32 %v222, 4294901760
    %v354 = vsub.f32 %v222, %v353
    %355 = vmatpush.msra.mxu0 %v354
    %v356 = vand.u32 %v221, 4294901760
    %v357 = vsub.f32 %v221, %v356
    %358 = vmatpush.msra.mxu0 %v357
    %v359 = vand.u32 %v220, 4294901760
    %v360 = vsub.f32 %v220, %v359
    %361 = vmatpush.msra.mxu0 %v360
    %v362 = vand.u32 %v234, 4294901760
    %v363 = vsub.f32 %v234, %v362
    %364 = vmatmul.f32.gmra.mxu0 %v363
    %v365 = vpop.f32.mrf.mxu0
    %v366 = vadd.f32 %v328, %v365
    %367 = vdwg.mxu0
    %368 = vmatpush.msra.mxu0 0.0
    %369 = vmatpush.msra.mxu0 0.0
    %370 = vmatpush.msra.mxu0 0.0
    %371 = vmatpush.msra.mxu0 0.0
    %372 = vmatpush.msra.mxu0 0.0
    %373 = vmatpush.msra.mxu0 0.0
    %374 = vmatpush.msra.mxu0 0.0
    %375 = vmatpush.msra.mxu0 0.0
    %v376 = vand.u32 %v227, 4294901760
    %377 = vmatpush.msra.mxu0 %v376
    %v378 = vand.u32 %v226, 4294901760
    %379 = vmatpush.msra.mxu0 %v378
    %v380 = vand.u32 %v225, 4294901760
    %381 = vmatpush.msra.mxu0 %v380
    %v382 = vand.u32 %v224, 4294901760
    %383 = vmatpush.msra.mxu0 %v382
    %v384 = vand.u32 %v223, 4294901760
    %385 = vmatpush.msra.mxu0 %v384
    %v386 = vand.u32 %v222, 4294901760
    %387 = vmatpush.msra.mxu0 %v386
    %v388 = vand.u32 %v221, 4294901760
    %389 = vmatpush.msra.mxu0 %v388
    %v390 = vand.u32 %v220, 4294901760
    %391 = vmatpush.msra.mxu0 %v390
    %v392 = vand.u32 %v234, 4294901760
    %v393 = vsub.f32 %v234, %v392
    %v394 = vand.u32 %v393, 4294901760
    %395 = vmatmul.f32.gmra.mxu0 %v394
    %v396 = vpop.f32.mrf.mxu0
    %v397 = vadd.f32 %v366, %v396
    %398 = vdwg.mxu0
    %399 = vmatpush.msra.mxu0 0.0
    %400 = vmatpush.msra.mxu0 0.0
    %401 = vmatpush.msra.mxu0 0.0
    %402 = vmatpush.msra.mxu0 0.0
    %403 = vmatpush.msra.mxu0 0.0
    %404 = vmatpush.msra.mxu0 0.0
    %405 = vmatpush.msra.mxu0 0.0
    %406 = vmatpush.msra.mxu0 0.0
    %v407 = vand.u32 %v227, 4294901760
    %v408 = vsub.f32 %v227, %v407
    %v409 = vand.u32 %v408, 4294901760
    %410 = vmatpush.msra.mxu0 %v409
    %v411 = vand.u32 %v226, 4294901760
    %v412 = vsub.f32 %v226, %v411
    %v413 = vand.u32 %v412, 4294901760
    %414 = vmatpush.msra.mxu0 %v413
    %v415 = vand.u32 %v225, 4294901760
    %v416 = vsub.f32 %v225, %v415
    %v417 = vand.u32 %v416, 4294901760
    %418 = vmatpush.msra.mxu0 %v417
    %v419 = vand.u32 %v224, 4294901760
    %v420 = vsub.f32 %v224, %v419
    %v421 = vand.u32 %v420, 4294901760
    %422 = vmatpush.msra.mxu0 %v421
    %v423 = vand.u32 %v223, 4294901760
    %v424 = vsub.f32 %v223, %v423
    %v425 = vand.u32 %v424, 4294901760
    %426 = vmatpush.msra.mxu0 %v425
    %v427 = vand.u32 %v222, 4294901760
    %v428 = vsub.f32 %v222, %v427
    %v429 = vand.u32 %v428, 4294901760
    %430 = vmatpush.msra.mxu0 %v429
    %v431 = vand.u32 %v221, 4294901760
    %v432 = vsub.f32 %v221, %v431
    %v433 = vand.u32 %v432, 4294901760
    %434 = vmatpush.msra.mxu0 %v433
    %v435 = vand.u32 %v220, 4294901760
    %v436 = vsub.f32 %v220, %v435
    %v437 = vand.u32 %v436, 4294901760
    %438 = vmatpush.msra.mxu0 %v437
    %v439 = vand.u32 %v234, 4294901760
    %440 = vmatmul.f32.gmra.mxu0 %v439
    %v441 = vpop.f32.mrf.mxu0
    %v442 = vadd.f32 %v397, %v441
    %443 = vdwg.mxu0
    %444 = vmatpush.msra.mxu0 0.0
    %445 = vmatpush.msra.mxu0 0.0
    %446 = vmatpush.msra.mxu0 0.0
    %447 = vmatpush.msra.mxu0 0.0
    %448 = vmatpush.msra.mxu0 0.0
    %449 = vmatpush.msra.mxu0 0.0
    %450 = vmatpush.msra.mxu0 0.0
    %451 = vmatpush.msra.mxu0 0.0
    %v452 = vand.u32 %v227, 4294901760
    %453 = vmatpush.msra.mxu0 %v452
    %v454 = vand.u32 %v226, 4294901760
    %455 = vmatpush.msra.mxu0 %v454
    %v456 = vand.u32 %v225, 4294901760
    %457 = vmatpush.msra.mxu0 %v456
    %v458 = vand.u32 %v224, 4294901760
    %459 = vmatpush.msra.mxu0 %v458
    %v460 = vand.u32 %v223, 4294901760
    %461 = vmatpush.msra.mxu0 %v460
    %v462 = vand.u32 %v222, 4294901760
    %463 = vmatpush.msra.mxu0 %v462
    %v464 = vand.u32 %v221, 4294901760
    %465 = vmatpush.msra.mxu0 %v464
    %v466 = vand.u32 %v220, 4294901760
    %467 = vmatpush.msra.mxu0 %v466
    %v468 = vand.u32 %v234, 4294901760
    %469 = vmatmul.f32.gmra.mxu0 %v468
    %v470 = vpop.f32.mrf.mxu0
    %v471 = vadd.f32 %v442, %v470
    %472 = vdwg.mxu0
    %v473 = vxor.u32 %v471, 2147483648
    %v474 = vmul.f32 %v473, 1.442695
    %v475 = vpow.pop %v474
    %v476 = vadd.f32 %v475, 1.0
    %v477 = vrcp.pop %v476
    %v478 = vmul.f32 %v476, %v477
    %v479 = vsub.f32 1.0, %v478
    %v480 = vmul.f32 %v477, %v479
    %v481 = vadd.f32 %v477, %v480
    %vm482 = vweird.f32 %v476
    %vm483 = vweird.f32 %v477
    %vm484 = vmor %vm482, %vm483
    %v485 = vsel %vm484, %v477, %v481
    %v486 = vand.u32 2147483647, %v476
    %vm487 = vcmp.eq.f32.partialorder %v486, 8.507059e+37
    %v488 = vand.u32 %v476, 2147483648
    %v489 = vor.u32 1.1754944e-38, %v488
    %v490 = vsel %vm487, %v489, %v485
    %v491 = vmul.f32 1.0, %v490
    %vm492 = vcmask 130048
    %493 = vst.msk [vmem:[#allocation2] sm:$0xff] %vm492, %v491
    // Predicated region
    $region22: #{tpu_custom_call.1} parent=1 // pred_check
      _
    $region23: #{tpu_custom_call.1} parent=1 // pred_check_branch
      %495 = sbr.rel (0) target = $region25
    $region24: #{tpu_custom_call.1} parent=1 // pred_region
      %497 = vsyncadd [#allocation3], 0
      %s499 = sshll.u32 [#allocation2], 4
      %s500 = int_to_ptr.vmem [resolvable:$true] %s499
      %s501 = sshll.u32 %s5, 4
      %s502 = int_to_ptr.hbm [resolvable:$true] %s501
      %504 = dma.vmem_to_hbm [thread:$0]  %s500, 128, %s502, [#allocation3]
    $region25: #{tpu_custom_call.1} parent=1 // pred_fallthru
      _
    // Predicated region
    $region26: #{tpu_custom_call.1} parent=1 // pred_check
      _
    $region27: #{tpu_custom_call.1} parent=1 // pred_check_branch
      %506 = sbr.rel (0) target = $region29
    $region28: #{tpu_custom_call.1} parent=1 // pred_region
      %508 = dma.done [#allocation3], 128
    $region29: #{tpu_custom_call.1} parent=1 // pred_fallthru
      _
    %509 = vsyncpa [#allocation3], 1

</llo_original>
